<compile_context>
chip_gen: v7x
topology: tpu7x:2x2x1
jax: 0.10.0
libtpu: 0.0.40
codegen_flags: <defaults>
</compile_context>

<pallas_src>
import jax
import jax.numpy as jnp
from jax.experimental import pallas as pl
from jax.experimental.pallas import tpu as pltpu


def _location_matmul_kernel(col_ref, w_ref, o_ref):
    # col_ref: (B*T, 2K)   im2col rows (all batches folded together)
    # w_ref:   (2K, A)     fused conv+dense weight
    # o_ref:   (B*T, A)
    o_ref[...] = jnp.dot(
        col_ref[...], w_ref[...],
        preferred_element_type=jnp.float32).astype(o_ref.dtype)


def location_layer_forward(x, conv_w, dense_w):
    """x: (B, 2, T) f32; conv_w: (F, 2, K); dense_w: (A, F). Returns (B, T, A)."""
    B, C, T = x.shape
    F_, C2, K = conv_w.shape
    A, F2 = dense_w.shape
    assert C == 2 and C2 == 2 and F2 == F_
    pad = (K - 1) // 2

    # --- Wrapper glue (XLA side) --------------------------------------------
    # Exact algebraic fusion of the conv weight and the dense weight: (2K, A).
    w_fused = conv_w.reshape(F_, 2 * K).T @ dense_w.T           # (2K, A)

    # im2col in the wrapper: column (c*K + k) of row (b*T + t) = x_pad[b, c, t+k].
    x_pad = jnp.pad(x, ((0, 0), (0, 0), (pad, pad)))            # (B, 2, T+2*pad)
    cols = jnp.stack(
        [x_pad[:, c, k:k + T] for c in range(2) for k in range(K)],
        axis=-1)                                                # (B, T, 2K)
    col_mat = cols.reshape(B * T, 2 * K)                        # (B*T, 2K)

    # --- Pallas kernel: one matmul, single grid step --------------------------
    # At these shapes everything fits in VMEM trivially.  If T (or B) grows
    # large, tile the row dimension (B*T) over a grid (row tile a multiple of
    # 8 sublanes) and keep the fused weight resident via a constant index_map.
    out_flat = pl.pallas_call(
        _location_matmul_kernel,
        out_shape=jax.ShapeDtypeStruct((B * T, A), x.dtype),
        in_specs=[
            pl.BlockSpec(memory_space=pltpu.MemorySpace.VMEM),
            pl.BlockSpec(memory_space=pltpu.MemorySpace.VMEM),
        ],
        out_specs=pl.BlockSpec(memory_space=pltpu.MemorySpace.VMEM),
    )(col_mat, w_fused)

    return out_flat.reshape(B, T, A)


def _reference(x, conv_w, dense_w):
    # Pure-JAX reference: conv1d (NCW, OIW) -> transpose -> linear.
    h = jax.lax.conv_general_dilated(
        x, conv_w, window_strides=(1,),
        padding=[((conv_w.shape[-1] - 1) // 2,) * 2],
        dimension_numbers=("NCW", "OIW", "NCW"))
    h = jnp.transpose(h, (0, 2, 1))          # (B, T, F)
    return h @ dense_w.T                     # (B, T, A)


if __name__ == "__main__":
    # Small shapes consistent with the module's forward.
    B, T = 2, 24
    attention_n_filters = 8
    attention_kernel_size = 5
    attention_dim = 16

    key = jax.random.PRNGKey(0)
    kx, kc, kd = jax.random.split(key, 3)

    x = jax.random.normal(kx, (B, 2, T), dtype=jnp.float32)
    # Deterministic synthetic parameters (shapes from __init__): no checkpoint load.
    conv_w = 0.1 * jax.random.normal(
        kc, (attention_n_filters, 2, attention_kernel_size), dtype=jnp.float32)
    dense_w = 0.1 * jax.random.normal(
        kd, (attention_dim, attention_n_filters), dtype=jnp.float32)

    out = location_layer_forward(x, conv_w, dense_w)
    out = jax.block_until_ready(out)

    ref = _reference(x, conv_w, dense_w)
    assert out.shape == (B, T, attention_dim)
    assert jnp.allclose(out, ref, atol=1e-5, rtol=1e-5), "mismatch vs reference"

    print("KERNEL_OK")
</pallas_src>

<mosaic_0001>
module attributes {stable_mosaic.version = 11 : i64} {
  func.func @_location_matmul_kernel(%arg0: memref<48x10xf32, #tpu.memory_space<vmem>>, %arg1: memref<10x16xf32, #tpu.memory_space<vmem>>, %arg2: memref<48x16xf32, #tpu.memory_space<vmem>>) attributes {dimension_semantics = [], scalar_prefetch = 0 : i64, scratch_operands = 0 : i64, tpu.core_type = #tpu.core_type<tc>} {
    %c0 = arith.constant 0 : index
    %c0_0 = arith.constant 0 : index
    %0 = vector.load %arg0[%c0, %c0_0] : memref<48x10xf32, #tpu.memory_space<vmem>>, vector<48x10xf32>
    %c0_1 = arith.constant 0 : index
    %c0_2 = arith.constant 0 : index
    %1 = vector.load %arg1[%c0_1, %c0_2] : memref<10x16xf32, #tpu.memory_space<vmem>>, vector<10x16xf32>
    %cst = arith.constant dense<0.000000e+00> : vector<48x16xf32>
    %2 = tpu.matmul %0, %1, %cst {dimension_numbers = #tpu.dot_dimension_numbers<[1], [0], [0], [1], [0, 0, 1, 1], [], []>} : vector<48x10xf32>, vector<10x16xf32>, vector<48x16xf32> -> vector<48x16xf32>
    %c0_3 = arith.constant 0 : index
    %c0_4 = arith.constant 0 : index
    %3 = vector.load %arg2[%c0_3, %c0_4] : memref<48x16xf32, #tpu.memory_space<vmem>>, vector<48x16xf32>
    tpu.vector_store %arg2[%c0_3, %c0_4], %2 {strides = array<i32>} : memref<48x16xf32, #tpu.memory_space<vmem>>, vector<48x16xf32>,
    return
  }
}

</mosaic_0001>

<llo_original>
// kernel: tpu_custom_call.1
$region0: #{tpu_custom_call.1}
  #allocation0 [shape = 'u32[]', space=smem, size = 0x4, offset = 0x4, fixed_abs, tag = 'smem constant byte address 0x4 - core index']
  #allocation1 [shape = 'u32[144,128]{1,0:T(1,128)}', space=vmem, size = 0x12000, scoped, tag = 'internal scratch']
  %s0 = inlined_call_operand.vmem [shape: f32[48,10], index: 0, kind: input, shape index: {}]
  %s1 = inlined_call_operand.vmem [shape: f32[10,16], index: 1, kind: input, shape index: {}]
  %s2 = inlined_call_operand.vmem [shape: f32[48,16], index: 2, kind: output, shape index: {}]
  %s3 = sld [smem:[#allocation0]]
  $region18: #{tpu_custom_call.1} parent=0
    _
  %s5 = ssub.s32 1, %s3
  %s6 = scalar_select 0, %s5, %s3
  // Predicated region
  $region2: #{tpu_custom_call.1} parent=0 // pred_check
    _
  $region3: #{tpu_custom_call.1} parent=0 // pred_check_branch
    %8 = sbr.rel (0) target = $region5
  $region4: #{tpu_custom_call.1} parent=0 // pred_region
    _
  $region5: #{tpu_custom_call.1} parent=0 // pred_fallthru
    _
  // Predicated region
  $region6: #{tpu_custom_call.1} parent=0 // pred_check
    _
  $region7: #{tpu_custom_call.1} parent=0 // pred_check_branch
    %10 = sbr.rel (0) target = $region9
  $region8: #{tpu_custom_call.1} parent=0 // pred_region
    _
  $region9: #{tpu_custom_call.1} parent=0 // pred_fallthru
    _
  %v11 = vld [vmem:[%s0] sm:$0xff]
  %v12 = vld [vmem:[%s0 + $0x8] sm:$0xff]
  %v13 = vld [vmem:[%s0 + $0x10] sm:$0xff]
  %v14 = vld [vmem:[%s0 + $0x18] sm:$0xff]
  %v15 = vld [vmem:[%s0 + $0x20] sm:$0xff]
  %v16 = vld [vmem:[%s0 + $0x28] sm:$0xff]
  %v17 = vld [vmem:[%s1] sm:$0xff]
  %v18 = vld [vmem:[%s1 + $0x8] sm:$0x3]
  %vm19 = vcmask 80896
  %v21 = vsel %vm19, %v11, 0
  %v24 = vsel %vm19, %v12, 0
  %v27 = vsel %vm19, %v13, 0
  %v30 = vsel %vm19, %v14, 0
  %v33 = vsel %vm19, %v15, 0
  %v36 = vsel %vm19, %v16, 0
  %vm38 = vcmask 1041408
  %v40 = vsel %vm38, %v18, 0
  %42 = vmatprep.subr.mxu0 0.0
  %43 = vmatpush1.msra.mxu0 %v17
  %44 = vmatprep.subr.mxu0 0.0
  %45 = vmatpush1.msra.mxu0 %v40
  %46 = vmatprep.subr.mxu0 0.0
  %47 = vmatpush1.msra.mxu0 0.0
  %48 = vmatprep.subr.mxu0 0.0
  %49 = vmatpush1.msra.mxu0 0.0
  %50 = vmatprep.subr.mxu0 0.0
  %51 = vmatpush1.msra.mxu0 0.0
  %52 = vmatprep.subr.mxu0 0.0
  %53 = vmatpush1.msra.mxu0 0.0
  %54 = vmatprep.subr.mxu0 0.0
  %55 = vmatpush1.msra.mxu0 0.0
  %56 = vmatprep.subr.mxu0 0.0
  %57 = vmatpush1.msra.mxu0 0.0
  %58 = vmatprep.subr.mxu0 0.0
  %59 = vmatpush1.msra.mxu0 0.0
  %60 = vmatprep.subr.mxu0 0.0
  %61 = vmatpush1.msra.mxu0 0.0
  %62 = vmatprep.subr.mxu0 0.0
  %63 = vmatpush1.msra.mxu0 0.0
  %64 = vmatprep.subr.mxu0 0.0
  %65 = vmatpush1.msra.mxu0 0.0
  %66 = vmatprep.subr.mxu0 0.0
  %67 = vmatpush1.msra.mxu0 0.0
  %68 = vmatprep.subr.mxu0 0.0
  %69 = vmatpush1.msra.mxu0 0.0
  %70 = vmatprep.subr.mxu0 0.0
  %71 = vmatpush1.msra.mxu0 0.0
  %72 = vmatprep.subr.mxu0 0.0
  %73 = vmatpush1.msra.mxu0 0.0
  %74 = vmatprep.subr.mxu0 0.0
  %75 = vmatpush1.msra.mxu0 0.0
  %76 = vmatprep.subr.mxu0 0.0
  %77 = vmatpush1.msra.mxu0 0.0
  %78 = vmatprep.subr.mxu0 0.0
  %79 = vmatpush1.msra.mxu0 0.0
  %80 = vmatprep.subr.mxu0 0.0
  %81 = vmatpush1.msra.mxu0 0.0
  %82 = vmatprep.subr.mxu0 0.0
  %83 = vmatpush1.msra.mxu0 0.0
  %84 = vmatprep.subr.mxu0 0.0
  %85 = vmatpush1.msra.mxu0 0.0
  %86 = vmatprep.subr.mxu0 0.0
  %87 = vmatpush1.msra.mxu0 0.0
  %88 = vmatprep.subr.mxu0 0.0
  %89 = vmatpush1.msra.mxu0 0.0
  %90 = vmatprep.subr.mxu0 0.0
  %91 = vmatpush1.msra.mxu0 0.0
  %92 = vmatprep.subr.mxu0 0.0
  %93 = vmatpush1.msra.mxu0 0.0
  %94 = vmatprep.subr.mxu0 0.0
  %95 = vmatpush1.msra.mxu0 0.0
  %96 = vmatprep.subr.mxu0 0.0
  %97 = vmatpush1.msra.mxu0 0.0
  %98 = vmatprep.subr.mxu0 0.0
  %99 = vmatpush1.msra.mxu0 0.0
  %100 = vmatprep.subr.mxu0 0.0
  %101 = vmatpush1.msra.mxu0 0.0
  %102 = vmatprep.subr.mxu0 0.0
  %103 = vmatpush1.msra.mxu0 0.0
  %104 = vmatprep.subr.mxu0 0.0
  %105 = vmatpush1.msra.mxu0 0.0
  %106 = vmatprep.mubr.f32.mxu0 0.0
  %107 = vmatmul.mubr.f32.gmra.mrb[0].mxu0 %v21
  %v108 = vpop.f32.mrb[0].mxu0
  %v109 = vadd.f32 0.0, %v108
  %v110 = vpop.f32.mrb[0].mxu0
  %111 = vmatprep.mubr.f32.mxu0 0.0
  %112 = vmatmul.mubr.f32.gmra.mrb[0].mxu0 %v24
  %v113 = vpop.f32.mrb[0].mxu0
  %v114 = vadd.f32 0.0, %v113
  %v115 = vpop.f32.mrb[0].mxu0
  %116 = vmatprep.mubr.f32.mxu0 0.0
  %117 = vmatmul.mubr.f32.gmra.mrb[0].mxu0 %v27
  %v118 = vpop.f32.mrb[0].mxu0
  %v119 = vadd.f32 0.0, %v118
  %v120 = vpop.f32.mrb[0].mxu0
  %121 = vmatprep.mubr.f32.mxu0 0.0
  %122 = vmatmul.mubr.f32.gmra.mrb[0].mxu0 %v30
  %v123 = vpop.f32.mrb[0].mxu0
  %v124 = vadd.f32 0.0, %v123
  %v125 = vpop.f32.mrb[0].mxu0
  %126 = vmatprep.mubr.f32.mxu0 0.0
  %127 = vmatmul.mubr.f32.gmra.mrb[0].mxu0 %v33
  %v128 = vpop.f32.mrb[0].mxu0
  %v129 = vadd.f32 0.0, %v128
  %v130 = vpop.f32.mrb[0].mxu0
  %131 = vmatprep.mubr.f32.mxu0 0.0
  %132 = vmatmul.mubr.f32.gmra.mrb[0].mxu0 %v36
  %v133 = vpop.f32.mrb[0].mxu0
  %v134 = vadd.f32 0.0, %v133
  %v135 = vpop.f32.mrb[0].mxu0
  %136 = vdwg.mxu0
  %vm137 = vcmask 130048
  %138 = vst.msk [vmem:[%s2] sm:$0xff] %vm137, %v109
  %139 = vst.msk [vmem:[%s2 + $0x8] sm:$0xff] %vm137, %v114
  %140 = vst.msk [vmem:[%s2 + $0x10] sm:$0xff] %vm137, %v119
  %141 = vst.msk [vmem:[%s2 + $0x18] sm:$0xff] %vm137, %v124
  %142 = vst.msk [vmem:[%s2 + $0x20] sm:$0xff] %vm137, %v129
  %143 = vst.msk [vmem:[%s2 + $0x28] sm:$0xff] %vm137, %v134
  // Predicated region
  $region10: #{tpu_custom_call.1} parent=0 // pred_check
    _
  $region11: #{tpu_custom_call.1} parent=0 // pred_check_branch
    %145 = sbr.rel (0) target = $region13
  $region12: #{tpu_custom_call.1} parent=0 // pred_region
    _
  $region13: #{tpu_custom_call.1} parent=0 // pred_fallthru
    _
  // Predicated region
  $region14: #{tpu_custom_call.1} parent=0 // pred_check
    _
  $region15: #{tpu_custom_call.1} parent=0 // pred_check_branch
    %147 = sbr.rel (0) target = $region17
  $region16: #{tpu_custom_call.1} parent=0 // pred_region
    _
  $region17: #{tpu_custom_call.1} parent=0 // pred_fallthru
    _

</llo_original>
